<compile_context>
chip_gen: v6e
topology: v6e:2x2x1
jax: 0.10.0
libtpu: 0.0.40
codegen_flags: <defaults>
</compile_context>

<pallas_src>
import jax
import jax.numpy as jnp
from jax.experimental import pallas as pl
from jax.experimental.pallas import tpu as pltpu


def _round_up(x, m):
    return (x + m - 1) // m * m


def _vmem_budget_bytes():
    """Usable VMEM per TensorCore, gated per generation (v5e/v6e: 128 MiB
    physical, v7x: 64 MiB per TC).  Keeps ~25% headroom for compiler scratch."""
    phys = 64 * 1024 * 1024  # conservative default (v7x per-TC)
    try:
        info = pltpu.get_tpu_info()
        phys = int(getattr(info, "vmem_capacity_bytes", phys))
    except Exception:
        pass
    return (phys * 3) // 4


# ---------------------------------------------------------------------------
# Kernels
# ---------------------------------------------------------------------------
def _mlp_resident_kernel(x_ref, w_ref, b_ref, o_ref):
    # Whole [K, H] weight + bias are VMEM-resident (constant block index).
    # x tile: [tm, K]; MXU contracts K directly, bias folded into the store.
    acc = jnp.dot(x_ref[...], w_ref[...], preferred_element_type=jnp.float32)
    o_ref[...] = (acc + b_ref[...].astype(jnp.float32)).astype(o_ref.dtype)


def _mlp_tiled_f32_kernel(x_ref, w_ref, b_ref, o_ref):
    # f32 output: accumulate straight into the resident output block (its block
    # index ignores k); bias folded into the k == 0 init, no finalize copy.
    @pl.when(pl.program_id(2) == 0)
    def _():
        o_ref[...] = jnp.broadcast_to(b_ref[...].astype(o_ref.dtype), o_ref.shape)

    o_ref[...] += jnp.dot(x_ref[...], w_ref[...],
                          preferred_element_type=jnp.float32)


def _mlp_tiled_acc_kernel(x_ref, w_ref, b_ref, o_ref, acc_ref):
    # Low-precision output: f32 scratch accumulator, cast once at k == last.
    k = pl.program_id(2)

    @pl.when(k == 0)
    def _():
        acc_ref[...] = jnp.broadcast_to(b_ref[...].astype(jnp.float32),
                                        acc_ref.shape)

    acc_ref[...] += jnp.dot(x_ref[...], w_ref[...],
                            preferred_element_type=jnp.float32)

    @pl.when(k == pl.num_programs(2) - 1)
    def _():
        o_ref[...] = acc_ref[...].astype(o_ref.dtype)


# ---------------------------------------------------------------------------
# Wrapper (parameter prep hoisted to init)
# ---------------------------------------------------------------------------
def make_mlp_forward(weight, bias):
    """Build forward(x, edge_index=None, data=None, merged=False) -> x @ W^T + b.

    weight: [hiddim, indim] (PyTorch nn.Linear layout); bias: [hiddim].
    Static-parameter work (transpose to [K, N], padding) is done once here.
    """
    hiddim, indim = weight.shape
    assert bias.shape == (hiddim,)

    budget = _vmem_budget_bytes()
    w_kn = jnp.asarray(weight).T            # [K, H] contraction-ready layout
    b_row = jnp.asarray(bias).reshape(1, hiddim)
    w_itemsize = w_kn.dtype.itemsize
    w_bytes = indim * hiddim * w_itemsize

    # ---------------- weight-resident fast path ----------------
    if w_bytes <= budget // 4:
        def forward(x, edge_index=None, data=None, merged=False):
            n_rows = x.shape[0]
            out_dtype = x.dtype
            per_row = 2 * (indim * x.dtype.itemsize
                           + hiddim * jnp.dtype(out_dtype).itemsize)
            row_cap = max(8, ((budget - w_bytes) // max(per_row, 1)) // 8 * 8)
            tm = int(min(1024, row_cap, _round_up(n_rows, 8)))
            # v7x megacore: expose >= 2 parallel row blocks when possible.
            if n_rows >= 16 and pl.cdiv(n_rows, tm) < 2:
                tm = _round_up(pl.cdiv(n_rows, 2), 8)
            grid = (pl.cdiv(n_rows, tm),)

            bytes_accessed = (x.size * x.dtype.itemsize + w_bytes
                              + hiddim * b_row.dtype.itemsize
                              + n_rows * hiddim * jnp.dtype(out_dtype).itemsize)

            return pl.pallas_call(
                _mlp_resident_kernel,
                out_shape=jax.ShapeDtypeStruct((n_rows, hiddim), out_dtype),
                grid_spec=pltpu.PrefetchScalarGridSpec(
                    num_scalar_prefetch=0,
                    grid=grid,
                    in_specs=[
                        pl.BlockSpec((tm, indim), lambda i: (i, 0)),      # x rows
                        pl.BlockSpec((indim, hiddim), lambda i: (0, 0)),  # resident W
                        pl.BlockSpec((1, hiddim), lambda i: (0, 0)),      # resident b
                    ],
                    out_specs=pl.BlockSpec((tm, hiddim), lambda i: (i, 0)),
                ),
                compiler_params=pltpu.CompilerParams(
                    dimension_semantics=("parallel",),
                    vmem_limit_bytes=budget,
                ),
                cost_estimate=pl.CostEstimate(
                    flops=2 * n_rows * hiddim * indim,
                    bytes_accessed=bytes_accessed,
                    transcendentals=0),
            )(x, w_kn, b_row)

        return forward

    # ---------------- general tiled (M, N, K) path ----------------
    big_vmem = budget >= 90 * 1024 * 1024          # v5e / v6e
    tn = int(min(512, _round_up(hiddim, 128)))
    tk = int(min(1024 if big_vmem else 512, _round_up(indim, 128)))
    tm_default = 512

    Kp = _round_up(indim, tk)
    Np = _round_up(hiddim, tn)
    w_pad = (w_kn if (Kp == indim and Np == hiddim)
             else jnp.pad(w_kn, ((0, Kp - indim), (0, Np - hiddim))))
    b_pad = b_row if Np == hiddim else jnp.pad(b_row, ((0, 0), (0, Np - hiddim)))

    def _footprint(tm_, x_it, o_it):
        return (2 * tm_ * tk * x_it          # x tiles (double-buffered)
                + 2 * tk * tn * w_itemsize   # weight tiles
                + 2 * tm_ * tn * o_it        # output tiles
                + tm_ * tn * 4)              # worst-case f32 scratch acc

    def forward(x, edge_index=None, data=None, merged=False):
        n_rows = x.shape[0]
        out_dtype = x.dtype
        x_it = x.dtype.itemsize
        o_it = jnp.dtype(out_dtype).itemsize

        tm = int(min(tm_default, _round_up(n_rows, 8)))
        while _footprint(tm, x_it, o_it) > budget and tm > 8:
            tm = max(8, tm // 2)
        # v7x megacore: make sure parallel (i, j) axes expose >= 2 blocks.
        if (n_rows >= 16 and pl.cdiv(n_rows, tm) < 2
                and pl.cdiv(hiddim, tn) < 2):
            tm = _round_up(pl.cdiv(n_rows, 2), 8)

        # Only K needs explicit padding (zeros in K contribute nothing); ragged
        # M / output-lane boundary blocks are handled by Pallas masked stores.
        xp = x if Kp == indim else jnp.pad(x, ((0, 0), (0, Kp - indim)))

        grid = (pl.cdiv(n_rows, tm), pl.cdiv(hiddim, tn), Kp // tk)

        if out_dtype == jnp.float32:
            kernel = _mlp_tiled_f32_kernel
            scratch = []
        else:
            kernel = _mlp_tiled_acc_kernel
            scratch = [pltpu.VMEM((tm, tn), jnp.float32)]

        bytes_accessed = (xp.size * x_it + w_pad.size * w_itemsize
                          + b_pad.size * b_pad.dtype.itemsize
                          + n_rows * hiddim * o_it)

        return pl.pallas_call(
            kernel,
            out_shape=jax.ShapeDtypeStruct((n_rows, hiddim), out_dtype),
            grid_spec=pltpu.PrefetchScalarGridSpec(
                num_scalar_prefetch=0,
                grid=grid,
                in_specs=[
                    pl.BlockSpec((tm, tk), lambda i, j, k: (i, k)),   # x tile
                    pl.BlockSpec((tk, tn), lambda i, j, k: (k, j)),   # W[K,N] tile
                    pl.BlockSpec((1, tn), lambda i, j, k: (0, j)),    # bias tile
                ],
                out_specs=pl.BlockSpec((tm, tn), lambda i, j, k: (i, j)),
                scratch_shapes=scratch,
            ),
            compiler_params=pltpu.CompilerParams(
                dimension_semantics=("parallel", "parallel", "arbitrary"),
                vmem_limit_bytes=budget,
            ),
            cost_estimate=pl.CostEstimate(
                flops=2 * n_rows * hiddim * Kp,
                bytes_accessed=bytes_accessed,
                transcendentals=0),
        )(xp, w_pad, b_pad)

    return forward


if __name__ == "__main__":
    key = jax.random.PRNGKey(0)
    N, indim, hiddim = 8, 16, 32

    kx, kw, kb = jax.random.split(key, 3)
    x = jax.random.normal(kx, (N, indim), dtype=jnp.float32)
    # deterministic glorot-ish init for weight [hiddim, indim], zeros bias
    limit = (6.0 / (indim + hiddim)) ** 0.5
    weight = jax.random.uniform(kw, (hiddim, indim), dtype=jnp.float32,
                                minval=-limit, maxval=limit)
    bias = jnp.zeros((hiddim,), dtype=jnp.float32)

    # edge_index is accepted but unused (matches the PyTorch forward)
    edge_index = jnp.zeros((2, 4), dtype=jnp.int32)

    mlp_forward = make_mlp_forward(weight, bias)   # param prep hoisted (once)
    out = mlp_forward(x, edge_index)
    jax.block_until_ready(out)

    # correctness check against plain-JAX reference
    ref = x @ weight.T + bias
    assert out.shape == (N, hiddim)
    assert jnp.allclose(out, ref, atol=1e-4, rtol=1e-4)
    print("KERNEL_OK")
</pallas_src>

<mosaic_0001>
module attributes {stable_mosaic.version = 11 : i64} {
  func.func @_mlp_resident_kernel(%arg0: i32, %arg1: memref<8x16xf32, #tpu.memory_space<vmem>>, %arg2: memref<16x32xf32, #tpu.memory_space<vmem>>, %arg3: memref<1x32xf32, #tpu.memory_space<vmem>>, %arg4: memref<8x32xf32, #tpu.memory_space<vmem>>) attributes {dimension_semantics = [#tpu.dimension_semantics<parallel>], iteration_bounds = array<i64: 1>, scalar_prefetch = 0 : i64, scratch_operands = 0 : i64, tpu.core_type = #tpu.core_type<tc>, window_params = [{transform_indices = @transform_0, window_bounds = array<i64: 8, 16>}, {pipeline_mode = #tpu.pipeline_mode<synchronous>, transform_indices = @transform_1, window_bounds = array<i64: 16, 32>}, {pipeline_mode = #tpu.pipeline_mode<synchronous>, transform_indices = @transform_2, window_bounds = array<i64: 1, 32>}, {transform_indices = @transform_3, window_bounds = array<i64: 8, 32>}]} {
    %c0 = arith.constant 0 : index
    %c0_0 = arith.constant 0 : index
    %0 = vector.load %arg1[%c0, %c0_0] : memref<8x16xf32, #tpu.memory_space<vmem>>, vector<8x16xf32>
    %c0_1 = arith.constant 0 : index
    %c0_2 = arith.constant 0 : index
    %1 = vector.load %arg2[%c0_1, %c0_2] : memref<16x32xf32, #tpu.memory_space<vmem>>, vector<16x32xf32>
    %cst = arith.constant dense<0.000000e+00> : vector<8x32xf32>
    %2 = tpu.matmul %0, %1, %cst {dimension_numbers = #tpu.dot_dimension_numbers<[1], [0], [0], [1], [0, 0, 1, 1], [], []>} : vector<8x16xf32>, vector<16x32xf32>, vector<8x32xf32> -> vector<8x32xf32>
    %c0_3 = arith.constant 0 : index
    %c0_4 = arith.constant 0 : index
    %3 = vector.load %arg3[%c0_3, %c0_4] : memref<1x32xf32, #tpu.memory_space<vmem>>, vector<1x32xf32>
    %4 = vector.broadcast %3 : vector<1x32xf32> to vector<8x32xf32>
    %5 = arith.addf %2, %4 : vector<8x32xf32>
    %c0_5 = arith.constant 0 : index
    %c0_6 = arith.constant 0 : index
    %6 = vector.load %arg4[%c0_5, %c0_6] : memref<8x32xf32, #tpu.memory_space<vmem>>, vector<8x32xf32>
    tpu.vector_store %arg4[%c0_5, %c0_6], %5 {strides = array<i32>} : memref<8x32xf32, #tpu.memory_space<vmem>>, vector<8x32xf32>,
    return
  }
  func.func @transform_0(%arg0: i32) -> (i32, i32) {
    %c0_i32 = arith.constant 0 : i32
    %c0_i32_0 = arith.constant 0 : i32
    return %arg0, %c0_i32 : i32, i32
  }
  func.func @transform_1(%arg0: i32) -> (i32, i32) {
    %c0_i32 = arith.constant 0 : i32
    %c0_i32_0 = arith.constant 0 : i32
    %c0_i32_1 = arith.constant 0 : i32
    return %c0_i32, %c0_i32_0 : i32, i32
  }
  func.func @transform_2(%arg0: i32) -> (i32, i32) {
    %c0_i32 = arith.constant 0 : i32
    %c0_i32_0 = arith.constant 0 : i32
    %c0_i32_1 = arith.constant 0 : i32
    return %c0_i32, %c0_i32_0 : i32, i32
  }
  func.func @transform_3(%arg0: i32) -> (i32, i32) {
    %c0_i32 = arith.constant 0 : i32
    %c0_i32_0 = arith.constant 0 : i32
    return %arg0, %c0_i32 : i32, i32
  }
}

</mosaic_0001>

<llo_original>
// kernel: tpu_custom_call.1
$region0: #{tpu_custom_call.1}
  #allocation0 [shape = 'u32[]', space=smem, size = 0x4, offset = 0x4, fixed_abs, tag = 'smem constant byte address 0x4 - core index']
  #allocation1 [shape = 'u32[144,128]{1,0:T(1,128)}', space=vmem, size = 0x12000, scoped, tag = 'internal scratch']
  %s0 = inlined_call_operand.hbm [shape: f32[8,16], index: 0, kind: input, shape index: {}]
  %s1 = inlined_call_operand.hbm [shape: f32[16,32], index: 1, kind: input, shape index: {}]
  %s2 = inlined_call_operand.vmem [shape: f32[1,32], index: 2, kind: input, shape index: {}]
  %s3 = inlined_call_operand.hbm [shape: f32[8,32], index: 3, kind: output, shape index: {}]
  %s4 = sld [smem:[#allocation0]]
  $region30: #{tpu_custom_call.1} parent=0
    _
  %s6 = ssub.s32 1, %s4
  %s7 = scalar_select 0, %s6, %s4
  $region1: #{tpu_custom_call.1} parent=0
    #allocation2 [shape = 'u8[4096]{0}', space=vmem, size = 0x1000, scoped, tag = 'input window, operand 0, single buffered']
    #allocation3 [shape = 's32[1]{0}', space=sflag, size = 0x4, scoped, tag = 'scoped memory for tpu_custom_call.1']
    #allocation4 [shape = 's32[1]{0}', space=sflag, size = 0x4, scoped, tag = 'scoped memory for tpu_custom_call.1']
    #allocation5 [shape = 'u8[8192]{0}', space=vmem, size = 0x2000, scoped, tag = 'input window, operand 1, single buffered']
    #allocation6 [shape = 's32[1]{0}', space=sflag, size = 0x4, scoped, tag = 'scoped memory for tpu_custom_call.1']
    #allocation7 [shape = 'u8[4096]{0}', space=vmem, size = 0x1000, scoped, tag = 'output window, operand 0, single buffered']
    %8 = vsyncpa [#allocation3], 0
    %9 = vsyncpa [#allocation6], 0
    %10 = vsyncpa [#allocation4], 0
    // Predicated region
    $region2: #{tpu_custom_call.1} parent=1 // pred_check
      _
    $region3: #{tpu_custom_call.1} parent=1 // pred_check_branch
      %12 = sbr.rel (0) target = $region5
    $region4: #{tpu_custom_call.1} parent=1 // pred_region
      %s14 = ssub.s32 128, 128
      %15 = vsyncadd [#allocation3], %s14
      %s17 = sshll.u32 [#allocation2], 4
      %s18 = int_to_ptr.vmem [resolvable:$true] %s17
      %20 = dma.hbm_to_vmem [thread:$0]  %s0, 128, %s18, [#allocation3]
    $region5: #{tpu_custom_call.1} parent=1 // pred_fallthru
      _
    // Predicated region
    $region6: #{tpu_custom_call.1} parent=1 // pred_check
      _
    $region7: #{tpu_custom_call.1} parent=1 // pred_check_branch
      %22 = sbr.rel (0) target = $region9
    $region8: #{tpu_custom_call.1} parent=1 // pred_region
      %s24 = ssub.s32 256, 256
      %25 = vsyncadd [#allocation6], %s24
      %s26 = sshll.u32 [#allocation5], 4
      %s27 = int_to_ptr.vmem [resolvable:$true] %s26
      %32 = dma.hbm_to_vmem [thread:$0]  %s1, 256, %s27, [#allocation6], 128, 128, 8
    $region9: #{tpu_custom_call.1} parent=1 // pred_fallthru
      _
    // Predicated region
    $region10: #{tpu_custom_call.1} parent=1 // pred_check
      _
    $region11: #{tpu_custom_call.1} parent=1 // pred_check_branch
      %34 = sbr.rel (0) target = $region13
    $region12: #{tpu_custom_call.1} parent=1 // pred_region
      _
    $region13: #{tpu_custom_call.1} parent=1 // pred_fallthru
      _
    // Predicated region
    $region14: #{tpu_custom_call.1} parent=1 // pred_check
      _
    $region15: #{tpu_custom_call.1} parent=1 // pred_check_branch
      %36 = sbr.rel (0) target = $region17
    $region16: #{tpu_custom_call.1} parent=1 // pred_region
      %37 = dma.done [#allocation3], 128
    $region17: #{tpu_custom_call.1} parent=1 // pred_fallthru
      _
    // Predicated region
    $region18: #{tpu_custom_call.1} parent=1 // pred_check
      _
    $region19: #{tpu_custom_call.1} parent=1 // pred_check_branch
      %39 = sbr.rel (0) target = $region21
    $region20: #{tpu_custom_call.1} parent=1 // pred_region
      %40 = dma.done [#allocation6], 256
    $region21: #{tpu_custom_call.1} parent=1 // pred_fallthru
      _
    %v41 = vld [vmem:[#allocation2] sm:$0xff]
    %v42 = vld [vmem:[#allocation5] sm:$0xff]
    %v43 = vld [vmem:[#allocation5 + $0x8] sm:$0xff]
    %v44 = vld [vmem:[%s2] sm:$0x1]
    %v46 = vlaneseq
    %v47 = vshrl.u32 %v46, 7
    %v48 = vsub.s32 0, %v47
    %v49 = vrot.slane %v44, %v48
    %vm51 = vcmask 130048
    %v53 = vsel %vm51, %v41, 0
    %55 = vmatprep.subr.mxu0 0.0
    %56 = vmatpush1.msra.mxu0 0.0
    %57 = vmatprep.subr.mxu0 0.0
    %58 = vmatpush1.msra.mxu0 0.0
    %59 = vmatprep.subr.mxu0 0.0
    %60 = vmatpush1.msra.mxu0 0.0
    %61 = vmatprep.subr.mxu0 0.0
    %62 = vmatpush1.msra.mxu0 0.0
    %63 = vmatprep.subr.mxu0 0.0
    %64 = vmatpush1.msra.mxu0 0.0
    %65 = vmatprep.subr.mxu0 0.0
    %66 = vmatpush1.msra.mxu0 0.0
    %67 = vmatprep.subr.mxu0 0.0
    %68 = vmatpush1.msra.mxu0 0.0
    %69 = vmatprep.subr.mxu0 0.0
    %70 = vmatpush1.msra.mxu0 0.0
    %71 = vmatprep.subr.mxu0 0.0
    %72 = vmatpush1.msra.mxu0 0.0
    %73 = vmatprep.subr.mxu0 0.0
    %74 = vmatpush1.msra.mxu0 0.0
    %75 = vmatprep.subr.mxu0 0.0
    %76 = vmatpush1.msra.mxu0 0.0
    %77 = vmatprep.subr.mxu0 0.0
    %78 = vmatpush1.msra.mxu0 0.0
    %79 = vmatprep.subr.mxu0 0.0
    %80 = vmatpush1.msra.mxu0 0.0
    %81 = vmatprep.subr.mxu0 0.0
    %82 = vmatpush1.msra.mxu0 0.0
    %83 = vmatprep.subr.mxu0 0.0
    %84 = vmatpush1.msra.mxu0 %v43
    %85 = vmatprep.subr.mxu0 0.0
    %86 = vmatpush1.msra.mxu0 %v42
    %87 = vmatprep.subr.mxu0 0.0
    %88 = vmatpush2.msra.mxu0 0.0
    %89 = vmatprep.subr.mxu0 0.0
    %90 = vmatpush2.msra.mxu0 0.0
    %91 = vmatprep.subr.mxu0 0.0
    %92 = vmatpush2.msra.mxu0 0.0
    %93 = vmatprep.subr.mxu0 0.0
    %94 = vmatpush2.msra.mxu0 0.0
    %95 = vmatprep.subr.mxu0 0.0
    %96 = vmatpush2.msra.mxu0 0.0
    %97 = vmatprep.subr.mxu0 0.0
    %98 = vmatpush2.msra.mxu0 0.0
    %99 = vmatprep.subr.mxu0 0.0
    %100 = vmatpush2.msra.mxu0 0.0
    %101 = vmatprep.subr.mxu0 0.0
    %102 = vmatpush2.msra.mxu0 0.0
    %103 = vmatprep.subr.mxu0 0.0
    %104 = vmatpush2.msra.mxu0 0.0
    %105 = vmatprep.subr.mxu0 0.0
    %106 = vmatpush2.msra.mxu0 0.0
    %107 = vmatprep.subr.mxu0 0.0
    %108 = vmatpush2.msra.mxu0 0.0
    %109 = vmatprep.subr.mxu0 0.0
    %110 = vmatpush2.msra.mxu0 0.0
    %111 = vmatprep.subr.mxu0 0.0
    %112 = vmatpush2.msra.mxu0 0.0
    %113 = vmatprep.subr.mxu0 0.0
    %114 = vmatpush2.msra.mxu0 0.0
    %115 = vmatprep.subr.mxu0 0.0
    %116 = vmatpush2.msra.mxu0 0.0
    %117 = vmatprep.subr.mxu0 0.0
    %118 = vmatpush2.msra.mxu0 0.0
    %119 = vmatprep.mubr.f32.mxu0 0.0
    %120 = vmatmul.mubr.f32.gmra.mxu0 %v53
    %v121 = vpop.f32.mrf.mxu0
    %v122 = vadd.f32 %v49, %v121
    %v123 = vpop.f32.mrf.mxu0
    %124 = vdwg.mxu0
    %vm125 = vcmask 261120
    %126 = vst.msk [vmem:[#allocation7] sm:$0xff] %vm125, %v122
    // Predicated region
    $region22: #{tpu_custom_call.1} parent=1 // pred_check
      _
    $region23: #{tpu_custom_call.1} parent=1 // pred_check_branch
      %128 = sbr.rel (0) target = $region25
    $region24: #{tpu_custom_call.1} parent=1 // pred_region
      %s130 = ssub.s32 128, 128
      %131 = vsyncadd [#allocation4], %s130
      %s133 = sshll.u32 [#allocation7], 4
      %s134 = int_to_ptr.vmem [resolvable:$true] %s133
      %136 = dma.vmem_to_hbm [thread:$0]  %s134, 128, %s3, [#allocation4]
    $region25: #{tpu_custom_call.1} parent=1 // pred_fallthru
      _
    // Predicated region
    $region26: #{tpu_custom_call.1} parent=1 // pred_check
      _
    $region27: #{tpu_custom_call.1} parent=1 // pred_check_branch
      %138 = sbr.rel (0) target = $region29
    $region28: #{tpu_custom_call.1} parent=1 // pred_region
      %139 = dma.done [#allocation4], 128
    $region29: #{tpu_custom_call.1} parent=1 // pred_fallthru
      _
    %140 = vsyncpa [#allocation3], 1
    %141 = vsyncpa [#allocation6], 1
    %142 = vsyncpa [#allocation4], 1

</llo_original>
